<compile_context>
chip_gen: v7x
topology: tpu7x:2x2x1
jax: 0.10.0
libtpu: 0.0.40
codegen_flags: <defaults>
</compile_context>

<pallas_src>
import functools

import jax
import jax.numpy as jnp
from jax.experimental import pallas as pl
from jax.experimental.pallas import tpu as pltpu


def _round_up(n, m):
    return (n + m - 1) // m * m


def quadratic_kernel(x_ref, w_ref, o_ref):
    # x_ref: (tb, d) VMEM tile, w_ref: (d, d) VMEM (resident), o_ref: (tb, 1) VMEM.
    x = x_ref[...]
    # MXU matmul, f32 accumulation; no symmetrization (mathematically redundant).
    xw = jnp.dot(x, w_ref[...], preferred_element_type=jnp.float32)
    # Per-row quadratic form: 0.5 * sum_j x_j * (W x)_j, reduced in f32.
    o_ref[...] = (0.5 * jnp.sum(xw * x, axis=-1, keepdims=True)).astype(o_ref.dtype)


@functools.partial(jax.jit, static_argnames=("block_b",))
def quadratic_forward(x, weight, *, block_b=512):
    """x: (..., d), weight: (d, d) -> (...,) float32 energies (PyTorch Quadratic.forward)."""
    batch_shape = x.shape[:-1]
    d = x.shape[-1]
    x2 = x.reshape(-1, d)
    B = x2.shape[0]

    # Large batch tiles (multiple of 8) for HBM-roofline pipelining; pad B to a tile multiple.
    tb = min(block_b, _round_up(max(B, 1), 8))
    B_pad = _round_up(B, tb)
    if B_pad != B:
        x2 = jnp.pad(x2, ((0, B_pad - B), (0, 0)))  # zero rows -> zero energy, sliced off
    nb = B_pad // tb

    x_item = jnp.dtype(x2.dtype).itemsize
    w_item = jnp.dtype(weight.dtype).itemsize
    # Resident W + double-buffered x tiles + outputs.
    vmem_needed = d * d * w_item + 2 * tb * d * x_item + 2 * tb * 4
    vmem_limit = None
    if vmem_needed > 30 * 1024 * 1024:
        # TODO(synk): for weights too large for VMEM (esp. v7x's 64 MiB), add feature-axis
        # (j,k) tiling with a (tb,1) scratch accumulator + pl.when init/writeback.
        vmem_limit = int(min(vmem_needed * 1.25, 127 * 1024 * 1024))

    out = pl.pallas_call(
        quadratic_kernel,
        out_shape=jax.ShapeDtypeStruct((B_pad, 1), jnp.float32),
        grid=(nb,),
        in_specs=[
            pl.BlockSpec((tb, d), lambda i: (i, 0)),   # stream batch tiles
            pl.BlockSpec((d, d), lambda i: (0, 0)),    # W loaded once, reused across tiles
        ],
        out_specs=pl.BlockSpec((tb, 1), lambda i: (i, 0)),
        compiler_params=pltpu.CompilerParams(
            dimension_semantics=("parallel",),          # shard batch tiles across TCs (v7x)
            vmem_limit_bytes=vmem_limit,
        ),
        cost_estimate=pl.CostEstimate(
            flops=2 * B_pad * d * d + 2 * B_pad * d,
            transcendentals=0,
            bytes_accessed=B_pad * d * x_item + d * d * w_item + B_pad * 4,
        ),
    )(x2, weight)

    return out[:B, 0].reshape(batch_shape)


def init_quadratic_weight(key, d, dtype=jnp.float32):
    # matches: weight.data.uniform_(-1e-05, 1e-05); weight.data.fill_diagonal_(1.0)
    w = jax.random.uniform(key, (d, d), dtype=dtype, minval=-1e-5, maxval=1e-5)
    w = w * (1.0 - jnp.eye(d, dtype=dtype)) + jnp.eye(d, dtype=dtype)
    return w


if __name__ == "__main__":
    key = jax.random.PRNGKey(0)
    k_w, k_x = jax.random.split(key)

    d = 32
    B = 8
    weight = init_quadratic_weight(k_w, d)
    x = jax.random.normal(k_x, (B, d), dtype=jnp.float32)

    out = quadratic_forward(x, weight)
    out = jax.block_until_ready(out)

    # pure-JAX reference of the PyTorch forward (with explicit symmetrization)
    w_sym = 0.5 * (weight + weight.T)
    ref = 0.5 * jnp.einsum('bj,jk,bk->b', x, w_sym, x)

    assert out.shape == (B,)
    assert jnp.allclose(out, ref, atol=1e-5, rtol=1e-5), (out, ref)
    print("KERNEL_OK")
</pallas_src>

<mosaic_0001>
module attributes {stable_mosaic.version = 11 : i64} {
  func.func @quadratic_kernel(%arg0: i32, %arg1: memref<8x32xf32, #tpu.memory_space<vmem>>, %arg2: memref<32x32xf32, #tpu.memory_space<vmem>>, %arg3: memref<8x1xf32, #tpu.memory_space<vmem>>) attributes {dimension_semantics = [#tpu.dimension_semantics<parallel>], iteration_bounds = array<i64: 1>, scalar_prefetch = 0 : i64, scratch_operands = 0 : i64, tpu.core_type = #tpu.core_type<tc>, window_params = [{transform_indices = @transform_0, window_bounds = array<i64: 8, 32>}, {pipeline_mode = #tpu.pipeline_mode<synchronous>, transform_indices = @transform_1, window_bounds = array<i64: 32, 32>}, {transform_indices = @transform_2, window_bounds = array<i64: 8, 1>}]} {
    %c0 = arith.constant 0 : index
    %c0_0 = arith.constant 0 : index
    %0 = vector.load %arg1[%c0, %c0_0] : memref<8x32xf32, #tpu.memory_space<vmem>>, vector<8x32xf32>
    %c0_1 = arith.constant 0 : index
    %c0_2 = arith.constant 0 : index
    %1 = vector.load %arg2[%c0_1, %c0_2] : memref<32x32xf32, #tpu.memory_space<vmem>>, vector<32x32xf32>
    %cst = arith.constant dense<0.000000e+00> : vector<8x32xf32>
    %2 = tpu.matmul %0, %1, %cst {dimension_numbers = #tpu.dot_dimension_numbers<[1], [0], [0], [1], [0, 0, 1, 1], [], []>} : vector<8x32xf32>, vector<32x32xf32>, vector<8x32xf32> -> vector<8x32xf32>
    %3 = arith.mulf %2, %0 : vector<8x32xf32>
    %cst_3 = arith.constant dense<0.000000e+00> : vector<8xf32>
    %4 = vector.multi_reduction <add>, %3, %cst_3 [1] : vector<8x32xf32> to vector<8xf32>
    %5 = vector.shape_cast %4 : vector<8xf32> to vector<8x1xf32>
    %cst_4 = arith.constant 5.000000e-01 : f32
    %6 = vector.broadcast %cst_4 : f32 to vector<8x1xf32>
    %7 = arith.mulf %6, %5 : vector<8x1xf32>
    %c0_5 = arith.constant 0 : index
    %c0_6 = arith.constant 0 : index
    %8 = vector.load %arg3[%c0_5, %c0_6] : memref<8x1xf32, #tpu.memory_space<vmem>>, vector<8x1xf32>
    tpu.vector_store %arg3[%c0_5, %c0_6], %7 {strides = array<i32>} : memref<8x1xf32, #tpu.memory_space<vmem>>, vector<8x1xf32>,
    return
  }
  func.func @transform_0(%arg0: i32) -> (i32, i32) {
    %c0_i32 = arith.constant 0 : i32
    %c0_i32_0 = arith.constant 0 : i32
    return %arg0, %c0_i32 : i32, i32
  }
  func.func @transform_1(%arg0: i32) -> (i32, i32) {
    %c0_i32 = arith.constant 0 : i32
    %c0_i32_0 = arith.constant 0 : i32
    %c0_i32_1 = arith.constant 0 : i32
    return %c0_i32, %c0_i32_0 : i32, i32
  }
  func.func @transform_2(%arg0: i32) -> (i32, i32) {
    %c0_i32 = arith.constant 0 : i32
    %c0_i32_0 = arith.constant 0 : i32
    return %arg0, %c0_i32 : i32, i32
  }
}

</mosaic_0001>

<llo_original>
// kernel: quadratic_forward.1
$region0: #{quadratic_forward.1}
  #allocation0 [shape = 'u32[]', space=smem, size = 0x4, offset = 0x4, fixed_abs, tag = 'smem constant byte address 0x4 - core index']
  #allocation1 [shape = 'u32[144,128]{1,0:T(1,128)}', space=vmem, size = 0x12000, scoped, tag = 'internal scratch']
  %s0 = inlined_call_operand.hbm [shape: f32[8,32], index: 0, kind: input, shape index: {}]
  %s1 = inlined_call_operand.hbm [shape: f32[32,32], index: 1, kind: input, shape index: {}]
  %s2 = inlined_call_operand.vmem [shape: f32[8,1], index: 2, kind: output, shape index: {}]
  %s3 = sld [smem:[#allocation0]]
  $region26: #{quadratic_forward.1} parent=0
    _
  %s5 = ssub.s32 1, %s3
  %s6 = scalar_select 0, %s5, %s3
  $region1: #{quadratic_forward.1} parent=0
    #allocation2 [shape = 'u8[4096]{0}', space=vmem, size = 0x1000, scoped, tag = 'input window, operand 0, single buffered']
    #allocation3 [shape = 's32[1]{0}', space=sflag, size = 0x4, scoped, tag = 'scoped memory for quadratic_forward.1']
    #allocation4 [shape = 'u8[16384]{0}', space=vmem, size = 0x4000, scoped, tag = 'input window, operand 1, single buffered']
    #allocation5 [shape = 's32[1]{0}', space=sflag, size = 0x4, scoped, tag = 'scoped memory for quadratic_forward.1']
    %7 = vsyncpa [#allocation3], 0
    %8 = vsyncpa [#allocation5], 0
    // Predicated region
    $region2: #{quadratic_forward.1} parent=1 // pred_check
      _
    $region3: #{quadratic_forward.1} parent=1 // pred_check_branch
      %10 = sbr.rel (0) target = $region5
    $region4: #{quadratic_forward.1} parent=1 // pred_region
      %s12 = ssub.s32 128, 128
      %13 = vsyncadd [#allocation3], %s12
      %s15 = sshll.u32 [#allocation2], 4
      %s16 = int_to_ptr.vmem [resolvable:$true] %s15
      %18 = dma.hbm_to_vmem [thread:$0]  %s0, 128, %s16, [#allocation3]
    $region5: #{quadratic_forward.1} parent=1 // pred_fallthru
      _
    // Predicated region
    $region6: #{quadratic_forward.1} parent=1 // pred_check
      _
    $region7: #{quadratic_forward.1} parent=1 // pred_check_branch
      %20 = sbr.rel (0) target = $region9
    $region8: #{quadratic_forward.1} parent=1 // pred_region
      %s22 = ssub.s32 512, 512
      %23 = vsyncadd [#allocation5], %s22
      %s24 = sshll.u32 [#allocation4], 4
      %s25 = int_to_ptr.vmem [resolvable:$true] %s24
      %30 = dma.hbm_to_vmem [thread:$0]  %s1, 512, %s25, [#allocation5], 128, 128, 8
    $region9: #{quadratic_forward.1} parent=1 // pred_fallthru
      _
    // Predicated region
    $region10: #{quadratic_forward.1} parent=1 // pred_check
      _
    $region11: #{quadratic_forward.1} parent=1 // pred_check_branch
      %32 = sbr.rel (0) target = $region13
    $region12: #{quadratic_forward.1} parent=1 // pred_region
      %33 = dma.done [#allocation3], 128
    $region13: #{quadratic_forward.1} parent=1 // pred_fallthru
      _
    // Predicated region
    $region14: #{quadratic_forward.1} parent=1 // pred_check
      _
    $region15: #{quadratic_forward.1} parent=1 // pred_check_branch
      %35 = sbr.rel (0) target = $region17
    $region16: #{quadratic_forward.1} parent=1 // pred_region
      %36 = dma.done [#allocation5], 512
    $region17: #{quadratic_forward.1} parent=1 // pred_fallthru
      _
    %v37 = vld [vmem:[#allocation2] sm:$0xff]
    %v38 = vld [vmem:[#allocation4] sm:$0xff]
    %v39 = vld [vmem:[#allocation4 + $0x8] sm:$0xff]
    %v40 = vld [vmem:[#allocation4 + $0x10] sm:$0xff]
    %v41 = vld [vmem:[#allocation4 + $0x18] sm:$0xff]
    %vm42 = vcmask 261120
    %v44 = vsel %vm42, %v37, 0
    %46 = vmatprep.subr.mxu0 0.0
    %47 = vmatpush1.msra.mxu0 %v38
    %48 = vmatprep.subr.mxu0 0.0
    %49 = vmatpush1.msra.mxu0 %v39
    %50 = vmatprep.subr.mxu0 0.0
    %51 = vmatpush1.msra.mxu0 %v40
    %52 = vmatprep.subr.mxu0 0.0
    %53 = vmatpush1.msra.mxu0 %v41
    %54 = vmatprep.subr.mxu0 0.0
    %55 = vmatpush1.msra.mxu0 0.0
    %56 = vmatprep.subr.mxu0 0.0
    %57 = vmatpush1.msra.mxu0 0.0
    %58 = vmatprep.subr.mxu0 0.0
    %59 = vmatpush1.msra.mxu0 0.0
    %60 = vmatprep.subr.mxu0 0.0
    %61 = vmatpush1.msra.mxu0 0.0
    %62 = vmatprep.subr.mxu0 0.0
    %63 = vmatpush1.msra.mxu0 0.0
    %64 = vmatprep.subr.mxu0 0.0
    %65 = vmatpush1.msra.mxu0 0.0
    %66 = vmatprep.subr.mxu0 0.0
    %67 = vmatpush1.msra.mxu0 0.0
    %68 = vmatprep.subr.mxu0 0.0
    %69 = vmatpush1.msra.mxu0 0.0
    %70 = vmatprep.subr.mxu0 0.0
    %71 = vmatpush1.msra.mxu0 0.0
    %72 = vmatprep.subr.mxu0 0.0
    %73 = vmatpush1.msra.mxu0 0.0
    %74 = vmatprep.subr.mxu0 0.0
    %75 = vmatpush1.msra.mxu0 0.0
    %76 = vmatprep.subr.mxu0 0.0
    %77 = vmatpush1.msra.mxu0 0.0
    %78 = vmatprep.subr.mxu0 0.0
    %79 = vmatpush1.msra.mxu0 0.0
    %80 = vmatprep.subr.mxu0 0.0
    %81 = vmatpush1.msra.mxu0 0.0
    %82 = vmatprep.subr.mxu0 0.0
    %83 = vmatpush1.msra.mxu0 0.0
    %84 = vmatprep.subr.mxu0 0.0
    %85 = vmatpush1.msra.mxu0 0.0
    %86 = vmatprep.subr.mxu0 0.0
    %87 = vmatpush1.msra.mxu0 0.0
    %88 = vmatprep.subr.mxu0 0.0
    %89 = vmatpush1.msra.mxu0 0.0
    %90 = vmatprep.subr.mxu0 0.0
    %91 = vmatpush1.msra.mxu0 0.0
    %92 = vmatprep.subr.mxu0 0.0
    %93 = vmatpush1.msra.mxu0 0.0
    %94 = vmatprep.subr.mxu0 0.0
    %95 = vmatpush1.msra.mxu0 0.0
    %96 = vmatprep.subr.mxu0 0.0
    %97 = vmatpush1.msra.mxu0 0.0
    %98 = vmatprep.subr.mxu0 0.0
    %99 = vmatpush1.msra.mxu0 0.0
    %100 = vmatprep.subr.mxu0 0.0
    %101 = vmatpush1.msra.mxu0 0.0
    %102 = vmatprep.subr.mxu0 0.0
    %103 = vmatpush1.msra.mxu0 0.0
    %104 = vmatprep.subr.mxu0 0.0
    %105 = vmatpush1.msra.mxu0 0.0
    %106 = vmatprep.subr.mxu0 0.0
    %107 = vmatpush1.msra.mxu0 0.0
    %108 = vmatprep.subr.mxu0 0.0
    %109 = vmatpush1.msra.mxu0 0.0
    %110 = vmatprep.mubr.f32.mxu0 0.0
    %111 = vmatmul.mubr.f32.gmra.mrb[0].mxu0 %v44
    %v112 = vpop.f32.mrb[0].mxu0
    %v113 = vadd.f32 0.0, %v112
    %v114 = vpop.f32.mrb[0].mxu0
    %115 = vdwg.mxu0
    %v116 = vmul.f32 %v113, %v37
    %v117 = vsel %vm42, %v116, 0.0
    %118 = vadd.xlane.f32.xlu0 %v117
    %v119 = vpop.xlane.xlu0 %118
    %v120 = vmul.f32 %v119, 0.5
    %vm121 = vcmask 7168
    %122 = vst.msk [vmem:[%s2] sm:$0xff] %vm121, %v120
    // Predicated region
    $region18: #{quadratic_forward.1} parent=1 // pred_check
      _
    $region19: #{quadratic_forward.1} parent=1 // pred_check_branch
      %124 = sbr.rel (0) target = $region21
    $region20: #{quadratic_forward.1} parent=1 // pred_region
      _
    $region21: #{quadratic_forward.1} parent=1 // pred_fallthru
      _
    // Predicated region
    $region22: #{quadratic_forward.1} parent=1 // pred_check
      _
    $region23: #{quadratic_forward.1} parent=1 // pred_check_branch
      %126 = sbr.rel (0) target = $region25
    $region24: #{quadratic_forward.1} parent=1 // pred_region
      _
    $region25: #{quadratic_forward.1} parent=1 // pred_fallthru
      _
    %127 = vsyncpa [#allocation3], 1
    %128 = vsyncpa [#allocation5], 1

</llo_original>
